<compile_context>
chip_gen: v7x
topology: tpu7x:2x2x1
jax: 0.10.0
libtpu: 0.0.40
codegen_flags: <defaults>
</compile_context>

<pallas_src>
import functools

import jax
import jax.numpy as jnp
from jax import lax
from jax.experimental import pallas as pl
from jax.experimental.pallas import tpu as pltpu


def bos_kernel(bos_ref, emb_ref, out_ref, acc_ref, len_ref, *, vc):
    k = pl.program_id(1)               # vocab-tile index (reduction axis)
    nk = pl.num_programs(1)

    bos = bos_ref[...]                 # [TB, S] int32 (same tile for all k)
    TB, S = bos.shape
    TV = emb_ref.shape[0]

    @pl.when(k == 0)
    def _():
        acc_ref[...] = jnp.zeros_like(acc_ref)

    # Dtype fed to the MXU for the counts operand: must represent the integer
    # counts exactly (bf16/f16 only when S <= 256).
    if emb_ref.dtype == jnp.float32 or S <= 256:
        dot_dtype = emb_ref.dtype
    else:
        dot_dtype = jnp.float32

    # Process this V tile in vreg-sized sub-chunks: build a [TB, cw] histogram
    # over S while it stays in vregs, then contract it against the matching
    # [cw, D] slab of the table and accumulate into acc_ref.
    for c0 in range(0, TV, vc):
        cw = min(vc, TV - c0)

        # (1, cw) iota of the global vocab ids of this chunk; broadcast in ==.
        iota = lax.broadcasted_iota(jnp.int32, (1, cw), 1) + (k * TV + c0)

        counts = jnp.zeros((TB, cw), jnp.float32)
        if S <= 64:
            for s in range(S):
                counts = counts + (bos[:, s:s + 1] == iota).astype(jnp.float32)
        else:
            def s_body(s, c):
                col = bos_ref[:, pl.ds(s, 1)]          # [TB, 1]
                return c + (col == iota).astype(jnp.float32)
            counts = lax.fori_loop(0, S, s_body, counts, unroll=8)

        if c0 == 0:
            # Chunk 0 of the k == 0 tile contains vocab id 0 (PAD), so
            # counts[:, 0] is the PAD count per row and
            # lengths = S - PAD count == (bos != 0).sum(dim=1).
            @pl.when(k == 0)
            def _():
                len_ref[...] = float(S) - counts[:, 0:1]

        # Row 0 of the table is zero (padding_idx=0), so PAD tokens contribute
        # nothing to the sum.
        acc_ref[...] += jnp.dot(counts.astype(dot_dtype),
                                emb_ref[pl.ds(c0, cw), :],
                                preferred_element_type=jnp.float32)

    @pl.when(k == nk - 1)
    def _():
        inv_len = pl.reciprocal(len_ref[...], approx=False)        # [TB, 1]
        out_ref[...] = (acc_ref[...] * inv_len).astype(out_ref.dtype)


def _pick_batch_tile(b):
    # 128 already fills the MXU height on v5e and keeps the histogram chunk
    # working set small; bigger tiles buy nothing here.
    for c in (128, 64, 32, 16, 8):
        if c <= b and b % c == 0:
            return c
    return b  # full extent: always a legal block shape


def _pad8(n):
    return -(-n // 8) * 8


def _pad128(n):
    return -(-n // 128) * 128


def bos_forward(bos, emb_table, *, tb=None, tv=None, table_vmem_budget=12 << 20):
    """bos: [B, S] int (0 = PAD), emb_table: [V, D] float -> [B, D] float32.

    Note: out-of-range nonzero ids (>= V) contribute 0 to the sum but still
    count toward lengths; PyTorch's nn.Embedding would raise instead.
    """
    bos = bos.astype(jnp.int32)
    B, S = bos.shape
    V, D = emb_table.shape
    itemsize = emb_table.dtype.itemsize

    # Batch tile.
    if tb is None:
        tb = _pick_batch_tile(B)
        # v7x has 2 TensorCores: keep the "parallel" batch axis >= 2 tiles when
        # the (8, x) sublane rule allows it.
        if B // tb == 1 and B >= 16 and (B // 2) % 8 == 0:
            tb = _pick_batch_tile(B // 2)

    # Vocab tile: full table if its double-buffered tile fits the VMEM budget,
    # otherwise the largest 8-multiple divisor of V that fits.
    if tv is None:
        if 2 * V * D * itemsize <= table_vmem_budget:
            tv = V
        else:
            cap = max(8, table_vmem_budget // (2 * D * itemsize))
            tv = V  # fallback: single tile (may exceed the budget)
            for c in range(int(min(V, cap)), 7, -1):
                if c % 8 == 0 and V % c == 0:
                    tv = c
                    break
    assert B % tb == 0 and V % tv == 0

    # In-kernel histogram chunk width: keep tb*vc <= 32K elements so the
    # counts accumulator (plus compare temps) stays close to vreg-resident.
    vc = tv
    for c in (512, 256, 128):
        if c <= tv and tb * c <= 32 * 1024:
            vc = c
            break

    nb, nkv = B // tb, V // tv

    # Advisory cost for the XLA scheduler.
    table_bytes = V * D * itemsize * (nb if nkv > 1 else 1)
    cost = pl.CostEstimate(
        flops=2 * B * V * D + 2 * B * S * V,
        transcendentals=0,
        bytes_accessed=int(table_bytes + B * S * 4 + B * D * 4),
    )

    # VMEM sizing, including the in-kernel counts/iota/compare intermediates.
    vmem_needed = (
        2 * _pad8(tb) * _pad128(S) * 4              # bos tiles (double-buffered)
        + 2 * _pad8(tv) * _pad128(D) * itemsize     # table tiles (double-buffered)
        + 2 * _pad8(tb) * _pad128(D) * 4            # output tiles (double-buffered)
        + _pad8(tb) * _pad128(D) * 4                # sum accumulator scratch
        + _pad8(tb) * 128 * 4                       # lengths scratch (lane-padded)
        + 3 * tb * vc * 4                           # counts + iota + compare temps
    )
    # Cap well below v7x's 64 MiB/TC physical VMEM to leave Mosaic headroom.
    vmem_limit = int(min(max(vmem_needed * 1.3 + (2 << 20), 16 << 20), 48 << 20))

    kernel = functools.partial(bos_kernel, vc=vc)

    return pl.pallas_call(
        kernel,
        out_shape=jax.ShapeDtypeStruct((B, D), jnp.float32),
        grid_spec=pltpu.PrefetchScalarGridSpec(
            num_scalar_prefetch=0,
            grid=(nb, nkv),                                   # reduction axis last
            in_specs=[
                pl.BlockSpec((tb, S), lambda i, k: (i, 0)),   # index tile
                pl.BlockSpec((tv, D), lambda i, k: (k, 0)),   # table (V-tiled)
            ],
            out_specs=pl.BlockSpec((tb, D), lambda i, k: (i, 0)),
            scratch_shapes=[
                pltpu.VMEM((tb, D), jnp.float32),             # sum accumulator
                pltpu.VMEM((tb, 1), jnp.float32),             # lengths
            ],
        ),
        compiler_params=pltpu.CompilerParams(
            dimension_semantics=("parallel", "arbitrary"),
            vmem_limit_bytes=vmem_limit,
        ),
        cost_estimate=cost,
    )(bos, emb_table)


if __name__ == "__main__":
    # Small, TPU-friendly shapes consistent with the module:
    B, S = 8, 16          # batch of words, max #substrings per word
    V, D = 128, 128       # bag-of-substrings vocab size, embedding_dim

    key = jax.random.PRNGKey(0)
    k_emb, k_idx, k_len = jax.random.split(key, 3)

    # Deterministic "nn.Embedding(V, D, padding_idx=0)": row 0 zeroed.
    emb_table = jax.random.normal(k_emb, (V, D), dtype=jnp.float32) * 0.1
    emb_table = emb_table.at[0].set(0.0)

    # Substring index ids in [1, V), right-padded with 0 to variable lengths.
    idx = jax.random.randint(k_idx, (B, S), 1, V, dtype=jnp.int32)
    lengths = jax.random.randint(k_len, (B,), 3, S + 1, dtype=jnp.int32)  # >= 3 non-pad
    pos = jnp.arange(S, dtype=jnp.int32)[None, :]
    bos = jnp.where(pos < lengths[:, None], idx, 0)

    out = bos_forward(bos, emb_table)
    out = jax.block_until_ready(out)

    # Pure-JAX reference of the PyTorch forward.
    ref = jnp.take(emb_table, bos, axis=0).sum(axis=1) / lengths[:, None].astype(jnp.float32)
    assert out.shape == (B, D)
    assert jnp.allclose(out, ref, atol=1e-5, rtol=1e-5)

    print("KERNEL_OK")
</pallas_src>

<mosaic_0001>
module attributes {stable_mosaic.version = 11 : i64} {
  func.func @bos_kernel(%arg0: i32, %arg1: i32, %arg2: memref<8x16xi32, #tpu.memory_space<vmem>>, %arg3: memref<128x128xf32, #tpu.memory_space<vmem>>, %arg4: memref<8x128xf32, #tpu.memory_space<vmem>>, %arg5: memref<8x128xf32, #tpu.memory_space<vmem>>, %arg6: memref<8x1xf32, #tpu.memory_space<vmem>>) attributes {dimension_semantics = [#tpu.dimension_semantics<parallel>, #tpu.dimension_semantics<arbitrary>], iteration_bounds = array<i64: 1, 1>, scalar_prefetch = 0 : i64, scratch_operands = 2 : i64, tpu.core_type = #tpu.core_type<tc>, window_params = [{transform_indices = @transform_0, window_bounds = array<i64: 8, 16>}, {transform_indices = @transform_1, window_bounds = array<i64: 128, 128>}, {transform_indices = @transform_2, window_bounds = array<i64: 8, 128>}]} {
    %c0 = arith.constant 0 : index
    %c0_0 = arith.constant 0 : index
    %0 = vector.load %arg2[%c0, %c0_0] : memref<8x16xi32, #tpu.memory_space<vmem>>, vector<8x16xi32>
    %c0_i32 = arith.constant 0 : i32
    %1 = arith.cmpi eq, %arg1, %c0_i32 : i32
    %2 = arith.extui %1 : i1 to i32
    %c0_i32_1 = arith.constant 0 : i32
    %3 = arith.cmpi ne, %2, %c0_i32_1 : i32
    scf.if %3 {
      %cst_14 = arith.constant 0.000000e+00 : f32
      %133 = vector.broadcast %cst_14 : f32 to vector<8x128xf32>
      %c0_15 = arith.constant 0 : index
      %c0_16 = arith.constant 0 : index
      %134 = vector.load %arg5[%c0_15, %c0_16] : memref<8x128xf32, #tpu.memory_space<vmem>>, vector<8x128xf32>
      tpu.vector_store %arg5[%c0_15, %c0_16], %133 {strides = array<i32>} : memref<8x128xf32, #tpu.memory_space<vmem>>, vector<8x128xf32>,
    } else {
    }
    %4 = tpu.iota {dimensions = array<i32: 1>} : vector<1x128xi32>
    %c128_i32 = arith.constant 128 : i32
    %5 = arith.muli %arg1, %c128_i32 : i32
    %c0_i32_2 = arith.constant 0 : i32
    %6 = arith.addi %5, %c0_i32_2 : i32
    %7 = vector.broadcast %6 : i32 to vector<1x128xi32>
    %8 = arith.addi %4, %7 : vector<1x128xi32>
    %cst = arith.constant 0.000000e+00 : f32
    %9 = vector.broadcast %cst : f32 to vector<8x128xf32>
    %10 = vector.extract_strided_slice %0 {offsets = [0, 0], sizes = [8, 1], strides = [1, 1]} : vector<8x16xi32> to vector<8x1xi32>
    %11 = vector.broadcast %10 : vector<8x1xi32> to vector<8x128xi32>
    %12 = vector.broadcast %8 : vector<1x128xi32> to vector<8x128xi32>
    %13 = arith.cmpi eq, %11, %12 : vector<8x128xi32>
    %14 = arith.extui %13 : vector<8x128xi1> to vector<8x128xi32>
    %15 = arith.sitofp %14 : vector<8x128xi32> to vector<8x128xf32>
    %16 = arith.addf %9, %15 : vector<8x128xf32>
    %17 = vector.extract_strided_slice %0 {offsets = [0, 1], sizes = [8, 1], strides = [1, 1]} : vector<8x16xi32> to vector<8x1xi32>
    %18 = vector.broadcast %17 : vector<8x1xi32> to vector<8x128xi32>
    %19 = vector.broadcast %8 : vector<1x128xi32> to vector<8x128xi32>
    %20 = arith.cmpi eq, %18, %19 : vector<8x128xi32>
    %21 = arith.extui %20 : vector<8x128xi1> to vector<8x128xi32>
    %22 = arith.sitofp %21 : vector<8x128xi32> to vector<8x128xf32>
    %23 = arith.addf %16, %22 : vector<8x128xf32>
    %24 = vector.extract_strided_slice %0 {offsets = [0, 2], sizes = [8, 1], strides = [1, 1]} : vector<8x16xi32> to vector<8x1xi32>
    %25 = vector.broadcast %24 : vector<8x1xi32> to vector<8x128xi32>
    %26 = vector.broadcast %8 : vector<1x128xi32> to vector<8x128xi32>
    %27 = arith.cmpi eq, %25, %26 : vector<8x128xi32>
    %28 = arith.extui %27 : vector<8x128xi1> to vector<8x128xi32>
    %29 = arith.sitofp %28 : vector<8x128xi32> to vector<8x128xf32>
    %30 = arith.addf %23, %29 : vector<8x128xf32>
    %31 = vector.extract_strided_slice %0 {offsets = [0, 3], sizes = [8, 1], strides = [1, 1]} : vector<8x16xi32> to vector<8x1xi32>
    %32 = vector.broadcast %31 : vector<8x1xi32> to vector<8x128xi32>
    %33 = vector.broadcast %8 : vector<1x128xi32> to vector<8x128xi32>
    %34 = arith.cmpi eq, %32, %33 : vector<8x128xi32>
    %35 = arith.extui %34 : vector<8x128xi1> to vector<8x128xi32>
    %36 = arith.sitofp %35 : vector<8x128xi32> to vector<8x128xf32>
    %37 = arith.addf %30, %36 : vector<8x128xf32>
    %38 = vector.extract_strided_slice %0 {offsets = [0, 4], sizes = [8, 1], strides = [1, 1]} : vector<8x16xi32> to vector<8x1xi32>
    %39 = vector.broadcast %38 : vector<8x1xi32> to vector<8x128xi32>
    %40 = vector.broadcast %8 : vector<1x128xi32> to vector<8x128xi32>
    %41 = arith.cmpi eq, %39, %40 : vector<8x128xi32>
    %42 = arith.extui %41 : vector<8x128xi1> to vector<8x128xi32>
    %43 = arith.sitofp %42 : vector<8x128xi32> to vector<8x128xf32>
    %44 = arith.addf %37, %43 : vector<8x128xf32>
    %45 = vector.extract_strided_slice %0 {offsets = [0, 5], sizes = [8, 1], strides = [1, 1]} : vector<8x16xi32> to vector<8x1xi32>
    %46 = vector.broadcast %45 : vector<8x1xi32> to vector<8x128xi32>
    %47 = vector.broadcast %8 : vector<1x128xi32> to vector<8x128xi32>
    %48 = arith.cmpi eq, %46, %47 : vector<8x128xi32>
    %49 = arith.extui %48 : vector<8x128xi1> to vector<8x128xi32>
    %50 = arith.sitofp %49 : vector<8x128xi32> to vector<8x128xf32>
    %51 = arith.addf %44, %50 : vector<8x128xf32>
    %52 = vector.extract_strided_slice %0 {offsets = [0, 6], sizes = [8, 1], strides = [1, 1]} : vector<8x16xi32> to vector<8x1xi32>
    %53 = vector.broadcast %52 : vector<8x1xi32> to vector<8x128xi32>
    %54 = vector.broadcast %8 : vector<1x128xi32> to vector<8x128xi32>
    %55 = arith.cmpi eq, %53, %54 : vector<8x128xi32>
    %56 = arith.extui %55 : vector<8x128xi1> to vector<8x128xi32>
    %57 = arith.sitofp %56 : vector<8x128xi32> to vector<8x128xf32>
    %58 = arith.addf %51, %57 : vector<8x128xf32>
    %59 = vector.extract_strided_slice %0 {offsets = [0, 7], sizes = [8, 1], strides = [1, 1]} : vector<8x16xi32> to vector<8x1xi32>
    %60 = vector.broadcast %59 : vector<8x1xi32> to vector<8x128xi32>
    %61 = vector.broadcast %8 : vector<1x128xi32> to vector<8x128xi32>
    %62 = arith.cmpi eq, %60, %61 : vector<8x128xi32>
    %63 = arith.extui %62 : vector<8x128xi1> to vector<8x128xi32>
    %64 = arith.sitofp %63 : vector<8x128xi32> to vector<8x128xf32>
    %65 = arith.addf %58, %64 : vector<8x128xf32>
    %66 = vector.extract_strided_slice %0 {offsets = [0, 8], sizes = [8, 1], strides = [1, 1]} : vector<8x16xi32> to vector<8x1xi32>
    %67 = vector.broadcast %66 : vector<8x1xi32> to vector<8x128xi32>
    %68 = vector.broadcast %8 : vector<1x128xi32> to vector<8x128xi32>
    %69 = arith.cmpi eq, %67, %68 : vector<8x128xi32>
    %70 = arith.extui %69 : vector<8x128xi1> to vector<8x128xi32>
    %71 = arith.sitofp %70 : vector<8x128xi32> to vector<8x128xf32>
    %72 = arith.addf %65, %71 : vector<8x128xf32>
    %73 = vector.extract_strided_slice %0 {offsets = [0, 9], sizes = [8, 1], strides = [1, 1]} : vector<8x16xi32> to vector<8x1xi32>
    %74 = vector.broadcast %73 : vector<8x1xi32> to vector<8x128xi32>
    %75 = vector.broadcast %8 : vector<1x128xi32> to vector<8x128xi32>
    %76 = arith.cmpi eq, %74, %75 : vector<8x128xi32>
    %77 = arith.extui %76 : vector<8x128xi1> to vector<8x128xi32>
    %78 = arith.sitofp %77 : vector<8x128xi32> to vector<8x128xf32>
    %79 = arith.addf %72, %78 : vector<8x128xf32>
    %80 = vector.extract_strided_slice %0 {offsets = [0, 10], sizes = [8, 1], strides = [1, 1]} : vector<8x16xi32> to vector<8x1xi32>
    %81 = vector.broadcast %80 : vector<8x1xi32> to vector<8x128xi32>
    %82 = vector.broadcast %8 : vector<1x128xi32> to vector<8x128xi32>
    %83 = arith.cmpi eq, %81, %82 : vector<8x128xi32>
    %84 = arith.extui %83 : vector<8x128xi1> to vector<8x128xi32>
    %85 = arith.sitofp %84 : vector<8x128xi32> to vector<8x128xf32>
    %86 = arith.addf %79, %85 : vector<8x128xf32>
    %87 = vector.extract_strided_slice %0 {offsets = [0, 11], sizes = [8, 1], strides = [1, 1]} : vector<8x16xi32> to vector<8x1xi32>
    %88 = vector.broadcast %87 : vector<8x1xi32> to vector<8x128xi32>
    %89 = vector.broadcast %8 : vector<1x128xi32> to vector<8x128xi32>
    %90 = arith.cmpi eq, %88, %89 : vector<8x128xi32>
    %91 = arith.extui %90 : vector<8x128xi1> to vector<8x128xi32>
    %92 = arith.sitofp %91 : vector<8x128xi32> to vector<8x128xf32>
    %93 = arith.addf %86, %92 : vector<8x128xf32>
    %94 = vector.extract_strided_slice %0 {offsets = [0, 12], sizes = [8, 1], strides = [1, 1]} : vector<8x16xi32> to vector<8x1xi32>
    %95 = vector.broadcast %94 : vector<8x1xi32> to vector<8x128xi32>
    %96 = vector.broadcast %8 : vector<1x128xi32> to vector<8x128xi32>
    %97 = arith.cmpi eq, %95, %96 : vector<8x128xi32>
    %98 = arith.extui %97 : vector<8x128xi1> to vector<8x128xi32>
    %99 = arith.sitofp %98 : vector<8x128xi32> to vector<8x128xf32>
    %100 = arith.addf %93, %99 : vector<8x128xf32>
    %101 = vector.extract_strided_slice %0 {offsets = [0, 13], sizes = [8, 1], strides = [1, 1]} : vector<8x16xi32> to vector<8x1xi32>
    %102 = vector.broadcast %101 : vector<8x1xi32> to vector<8x128xi32>
    %103 = vector.broadcast %8 : vector<1x128xi32> to vector<8x128xi32>
    %104 = arith.cmpi eq, %102, %103 : vector<8x128xi32>
    %105 = arith.extui %104 : vector<8x128xi1> to vector<8x128xi32>
    %106 = arith.sitofp %105 : vector<8x128xi32> to vector<8x128xf32>
    %107 = arith.addf %100, %106 : vector<8x128xf32>
    %108 = vector.extract_strided_slice %0 {offsets = [0, 14], sizes = [8, 1], strides = [1, 1]} : vector<8x16xi32> to vector<8x1xi32>
    %109 = vector.broadcast %108 : vector<8x1xi32> to vector<8x128xi32>
    %110 = vector.broadcast %8 : vector<1x128xi32> to vector<8x128xi32>
    %111 = arith.cmpi eq, %109, %110 : vector<8x128xi32>
    %112 = arith.extui %111 : vector<8x128xi1> to vector<8x128xi32>
    %113 = arith.sitofp %112 : vector<8x128xi32> to vector<8x128xf32>
    %114 = arith.addf %107, %113 : vector<8x128xf32>
    %115 = vector.extract_strided_slice %0 {offsets = [0, 15], sizes = [8, 1], strides = [1, 1]} : vector<8x16xi32> to vector<8x1xi32>
    %116 = vector.broadcast %115 : vector<8x1xi32> to vector<8x128xi32>
    %117 = vector.broadcast %8 : vector<1x128xi32> to vector<8x128xi32>
    %118 = arith.cmpi eq, %116, %117 : vector<8x128xi32>
    %119 = arith.extui %118 : vector<8x128xi1> to vector<8x128xi32>
    %120 = arith.sitofp %119 : vector<8x128xi32> to vector<8x128xf32>
    %121 = arith.addf %114, %120 : vector<8x128xf32>
    %c0_i32_3 = arith.constant 0 : i32
    %122 = arith.cmpi eq, %arg1, %c0_i32_3 : i32
    %123 = arith.extui %122 : i1 to i32
    %c0_i32_4 = arith.constant 0 : i32
    %124 = arith.cmpi ne, %123, %c0_i32_4 : i32
    scf.if %124 {
      %133 = vector.extract_strided_slice %121 {offsets = [0, 0], sizes = [8, 1], strides = [1, 1]} : vector<8x128xf32> to vector<8x1xf32>
      %cst_14 = arith.constant 1.600000e+01 : f32
      %134 = vector.broadcast %cst_14 : f32 to vector<8x1xf32>
      %135 = arith.subf %134, %133 : vector<8x1xf32>
      %c0_15 = arith.constant 0 : index
      %c0_16 = arith.constant 0 : index
      %136 = vector.load %arg6[%c0_15, %c0_16] : memref<8x1xf32, #tpu.memory_space<vmem>>, vector<8x1xf32>
      tpu.vector_store %arg6[%c0_15, %c0_16], %135 {strides = array<i32>} : memref<8x1xf32, #tpu.memory_space<vmem>>, vector<8x1xf32>,
    } else {
    }
    %c0_5 = arith.constant 0 : index
    %c0_6 = arith.constant 0 : index
    %125 = vector.load %arg5[%c0_5, %c0_6] : memref<8x128xf32, #tpu.memory_space<vmem>>, vector<8x128xf32>
    %c0_7 = arith.constant 0 : index
    %c0_8 = arith.constant 0 : index
    %126 = vector.load %arg3[%c0_7, %c0_8] : memref<128x128xf32, #tpu.memory_space<vmem>>, vector<128x128xf32>
    %cst_9 = arith.constant dense<0.000000e+00> : vector<8x128xf32>
    %127 = tpu.matmul %121, %126, %cst_9 {dimension_numbers = #tpu.dot_dimension_numbers<[1], [0], [0], [1], [0, 0, 1, 1], [], []>} : vector<8x128xf32>, vector<128x128xf32>, vector<8x128xf32> -> vector<8x128xf32>
    %128 = arith.addf %125, %127 : vector<8x128xf32>
    %c0_10 = arith.constant 0 : index
    %c0_11 = arith.constant 0 : index
    %129 = vector.load %arg5[%c0_10, %c0_11] : memref<8x128xf32, #tpu.memory_space<vmem>>, vector<8x128xf32>
    tpu.vector_store %arg5[%c0_10, %c0_11], %128 {strides = array<i32>} : memref<8x128xf32, #tpu.memory_space<vmem>>, vector<8x128xf32>,
    %c0_i32_12 = arith.constant 0 : i32
    %130 = arith.cmpi eq, %arg1, %c0_i32_12 : i32
    %131 = arith.extui %130 : i1 to i32
    %c0_i32_13 = arith.constant 0 : i32
    %132 = arith.cmpi ne, %131, %c0_i32_13 : i32
    scf.if %132 {
      %c0_14 = arith.constant 0 : index
      %c0_15 = arith.constant 0 : index
      %133 = vector.load %arg6[%c0_14, %c0_15] : memref<8x1xf32, #tpu.memory_space<vmem>>, vector<8x1xf32>
      %134 = tpu.reciprocal %133 : vector<8x1xf32> -> vector<8x1xf32>
      %c0_16 = arith.constant 0 : index
      %c0_17 = arith.constant 0 : index
      %135 = vector.load %arg5[%c0_16, %c0_17] : memref<8x128xf32, #tpu.memory_space<vmem>>, vector<8x128xf32>
      %136 = vector.broadcast %134 : vector<8x1xf32> to vector<8x128xf32>
      %137 = arith.mulf %135, %136 : vector<8x128xf32>
      %c0_18 = arith.constant 0 : index
      %c0_19 = arith.constant 0 : index
      %138 = vector.load %arg4[%c0_18, %c0_19] : memref<8x128xf32, #tpu.memory_space<vmem>>, vector<8x128xf32>
      tpu.vector_store %arg4[%c0_18, %c0_19], %137 {strides = array<i32>} : memref<8x128xf32, #tpu.memory_space<vmem>>, vector<8x128xf32>,
    } else {
    }
    return
  }
  func.func @transform_0(%arg0: i32, %arg1: i32) -> (i32, i32) {
    %c0_i32 = arith.constant 0 : i32
    %c0_i32_0 = arith.constant 0 : i32
    return %arg0, %c0_i32 : i32, i32
  }
  func.func @transform_1(%arg0: i32, %arg1: i32) -> (i32, i32) {
    %c0_i32 = arith.constant 0 : i32
    %c0_i32_0 = arith.constant 0 : i32
    return %arg1, %c0_i32 : i32, i32
  }
  func.func @transform_2(%arg0: i32, %arg1: i32) -> (i32, i32) {
    %c0_i32 = arith.constant 0 : i32
    %c0_i32_0 = arith.constant 0 : i32
    return %arg0, %c0_i32 : i32, i32
  }
}

</mosaic_0001>

<llo_original>
// kernel: tpu_custom_call.1
$region0: #{tpu_custom_call.1}
  #allocation0 [shape = 'u32[]', space=smem, size = 0x4, offset = 0x4, fixed_abs, tag = 'smem constant byte address 0x4 - core index']
  #allocation1 [shape = 'u32[144,128]{1,0:T(1,128)}', space=vmem, size = 0x12000, scoped, tag = 'internal scratch']
  #allocation2 [shape = 'f32[8,128]{1,0:T(8,128)}', space=vmem, size = 0x1000, scoped, tag = 'scratch operand']
  #allocation3 [shape = 'f32[8,1]{1,0:T(8,128)}', space=vmem, size = 0x1000, scoped, tag = 'scratch operand']
  %s0 = inlined_call_operand.hbm [shape: s32[8,16], index: 0, kind: input, shape index: {}]
  %s1 = inlined_call_operand.hbm [shape: f32[128,128], index: 1, kind: input, shape index: {}]
  %s2 = inlined_call_operand.hbm [shape: f32[8,128], index: 2, kind: output, shape index: {}]
  %s3 = sld [smem:[#allocation0]]
  $region38: #{tpu_custom_call.1} parent=0
    _
  %s5 = ssub.s32 1, %s3
  %s6 = scalar_select 0, %s5, %s3
  $region1: #{tpu_custom_call.1} parent=0
    #allocation4 [shape = 'u8[4096]{0}', space=vmem, size = 0x1000, scoped, tag = 'input window, operand 0, single buffered']
    #allocation5 [shape = 's32[1]{0}', space=sflag, size = 0x4, scoped, tag = 'scoped memory for tpu_custom_call.1']
    #allocation6 [shape = 's32[1]{0}', space=sflag, size = 0x4, scoped, tag = 'scoped memory for tpu_custom_call.1']
    #allocation7 [shape = 'u8[65536]{0}', space=vmem, size = 0x10000, scoped, tag = 'input window, operand 1, single buffered']
    #allocation8 [shape = 's32[1]{0}', space=sflag, size = 0x4, scoped, tag = 'scoped memory for tpu_custom_call.1']
    #allocation9 [shape = 'u8[4096]{0}', space=vmem, size = 0x1000, scoped, tag = 'output window, operand 0, single buffered']
    %7 = vsyncpa [#allocation5], 0
    %8 = vsyncpa [#allocation8], 0
    %9 = vsyncpa [#allocation6], 0
    // Predicated region
    $region2: #{tpu_custom_call.1} parent=1 // pred_check
      _
    $region3: #{tpu_custom_call.1} parent=1 // pred_check_branch
      %11 = sbr.rel (0) target = $region5
    $region4: #{tpu_custom_call.1} parent=1 // pred_region
      %s13 = ssub.s32 128, 128
      %14 = vsyncadd [#allocation5], %s13
      %s16 = sshll.u32 [#allocation4], 4
      %s17 = int_to_ptr.vmem [resolvable:$true] %s16
      %19 = dma.hbm_to_vmem [thread:$0]  %s0, 128, %s17, [#allocation5]
    $region5: #{tpu_custom_call.1} parent=1 // pred_fallthru
      _
    // Predicated region
    $region6: #{tpu_custom_call.1} parent=1 // pred_check
      _
    $region7: #{tpu_custom_call.1} parent=1 // pred_check_branch
      %21 = sbr.rel (0) target = $region9
    $region8: #{tpu_custom_call.1} parent=1 // pred_region
      %s23 = ssub.s32 2048, 2048
      %24 = vsyncadd [#allocation8], %s23
      %s25 = sshll.u32 [#allocation7], 4
      %s26 = int_to_ptr.vmem [resolvable:$true] %s25
      %31 = dma.hbm_to_vmem [thread:$0]  %s1, 2048, %s26, [#allocation8], 128, 128, 8
    $region9: #{tpu_custom_call.1} parent=1 // pred_fallthru
      _
    // Predicated region
    $region10: #{tpu_custom_call.1} parent=1 // pred_check
      _
    $region11: #{tpu_custom_call.1} parent=1 // pred_check_branch
      %33 = sbr.rel (0) target = $region13
    $region12: #{tpu_custom_call.1} parent=1 // pred_region
      %34 = dma.done [#allocation5], 128
    $region13: #{tpu_custom_call.1} parent=1 // pred_fallthru
      _
    // Predicated region
    $region14: #{tpu_custom_call.1} parent=1 // pred_check
      _
    $region15: #{tpu_custom_call.1} parent=1 // pred_check_branch
      %36 = sbr.rel (0) target = $region17
    $region16: #{tpu_custom_call.1} parent=1 // pred_region
      %37 = dma.done [#allocation8], 2048
    $region17: #{tpu_custom_call.1} parent=1 // pred_fallthru
      _
    %v38 = vld [vmem:[#allocation4] sm:$0xff]
    %p39 = scmp.eq.s32.totalorder 0, 0
    // Predicated region
    $region18: #{tpu_custom_call.1} parent=1 // pred_check
      %p40 = pneg %p39
    $region19: #{tpu_custom_call.1} parent=1 // pred_check_branch
      %42 = sbr.rel (%p40) target = $region21
    $region20: #{tpu_custom_call.1} parent=1 // pred_region
      %43 = vst [vmem:[#allocation2] sm:$0xff] 0.0
    $region21: #{tpu_custom_call.1} parent=1 // pred_fallthru
      _
    %v44 = vlaneseq
    %v45 = vand.u32 %v44, 127
    %s46 = smul.u32 0, 128
    %v47 = vstv %s46
    %v48 = vadd.s32 %v45, %v47
    %49 = vset.pattern.permute.xlu0 0
    %50 = vperm.xlu0 %49, %v38
    %v51 = vpop.permute.xlu0 %50
    %vm52 = vcmp.eq.s32.totalorder %v51, %v48
    %v53 = vsel %vm52, 1, 0
    %v54 = vcvt.s32.f32 %v53
    %v55 = vadd.f32 %v54, 0.0
    %56 = vset.pattern.permute.xlu0 1
    %57 = vperm.xlu0 %56, %v38
    %v58 = vpop.permute.xlu0 %57
    %vm59 = vcmp.eq.s32.totalorder %v58, %v48
    %v60 = vsel %vm59, 1, 0
    %v61 = vcvt.s32.f32 %v60
    %v62 = vadd.f32 %v55, %v61
    %63 = vset.pattern.permute.xlu0 2
    %64 = vperm.xlu0 %63, %v38
    %v65 = vpop.permute.xlu0 %64
    %vm66 = vcmp.eq.s32.totalorder %v65, %v48
    %v67 = vsel %vm66, 1, 0
    %v68 = vcvt.s32.f32 %v67
    %v69 = vadd.f32 %v62, %v68
    %70 = vset.pattern.permute.xlu0 3
    %71 = vperm.xlu0 %70, %v38
    %v72 = vpop.permute.xlu0 %71
    %vm73 = vcmp.eq.s32.totalorder %v72, %v48
    %v74 = vsel %vm73, 1, 0
    %v75 = vcvt.s32.f32 %v74
    %v76 = vadd.f32 %v69, %v75
    %77 = vset.pattern.permute.xlu0 4
    %78 = vperm.xlu0 %77, %v38
    %v79 = vpop.permute.xlu0 %78
    %vm80 = vcmp.eq.s32.totalorder %v79, %v48
    %v81 = vsel %vm80, 1, 0
    %v82 = vcvt.s32.f32 %v81
    %v83 = vadd.f32 %v76, %v82
    %84 = vset.pattern.permute.xlu0 5
    %85 = vperm.xlu0 %84, %v38
    %v86 = vpop.permute.xlu0 %85
    %vm87 = vcmp.eq.s32.totalorder %v86, %v48
    %v88 = vsel %vm87, 1, 0
    %v89 = vcvt.s32.f32 %v88
    %v90 = vadd.f32 %v83, %v89
    %91 = vset.pattern.permute.xlu0 6
    %92 = vperm.xlu0 %91, %v38
    %v93 = vpop.permute.xlu0 %92
    %vm94 = vcmp.eq.s32.totalorder %v93, %v48
    %v95 = vsel %vm94, 1, 0
    %v96 = vcvt.s32.f32 %v95
    %v97 = vadd.f32 %v90, %v96
    %98 = vset.pattern.permute.xlu0 7
    %99 = vperm.xlu0 %98, %v38
    %v100 = vpop.permute.xlu0 %99
    %vm101 = vcmp.eq.s32.totalorder %v100, %v48
    %v102 = vsel %vm101, 1, 0
    %v103 = vcvt.s32.f32 %v102
    %v104 = vadd.f32 %v97, %v103
    %105 = vset.pattern.permute.xlu0 8
    %106 = vperm.xlu0 %105, %v38
    %v107 = vpop.permute.xlu0 %106
    %vm108 = vcmp.eq.s32.totalorder %v107, %v48
    %v109 = vsel %vm108, 1, 0
    %v110 = vcvt.s32.f32 %v109
    %v111 = vadd.f32 %v104, %v110
    %112 = vset.pattern.permute.xlu0 9
    %113 = vperm.xlu0 %112, %v38
    %v114 = vpop.permute.xlu0 %113
    %vm115 = vcmp.eq.s32.totalorder %v114, %v48
    %v116 = vsel %vm115, 1, 0
    %v117 = vcvt.s32.f32 %v116
    %v118 = vadd.f32 %v111, %v117
    %119 = vset.pattern.permute.xlu0 10
    %120 = vperm.xlu0 %119, %v38
    %v121 = vpop.permute.xlu0 %120
    %vm122 = vcmp.eq.s32.totalorder %v121, %v48
    %v123 = vsel %vm122, 1, 0
    %v124 = vcvt.s32.f32 %v123
    %v125 = vadd.f32 %v118, %v124
    %126 = vset.pattern.permute.xlu0 11
    %127 = vperm.xlu0 %126, %v38
    %v128 = vpop.permute.xlu0 %127
    %vm129 = vcmp.eq.s32.totalorder %v128, %v48
    %v130 = vsel %vm129, 1, 0
    %v131 = vcvt.s32.f32 %v130
    %v132 = vadd.f32 %v125, %v131
    %133 = vset.pattern.permute.xlu0 12
    %134 = vperm.xlu0 %133, %v38
    %v135 = vpop.permute.xlu0 %134
    %vm136 = vcmp.eq.s32.totalorder %v135, %v48
    %v137 = vsel %vm136, 1, 0
    %v138 = vcvt.s32.f32 %v137
    %v139 = vadd.f32 %v132, %v138
    %140 = vset.pattern.permute.xlu0 13
    %141 = vperm.xlu0 %140, %v38
    %v142 = vpop.permute.xlu0 %141
    %vm143 = vcmp.eq.s32.totalorder %v142, %v48
    %v144 = vsel %vm143, 1, 0
    %v145 = vcvt.s32.f32 %v144
    %v146 = vadd.f32 %v139, %v145
    %147 = vset.pattern.permute.xlu0 14
    %148 = vperm.xlu0 %147, %v38
    %v149 = vpop.permute.xlu0 %148
    %vm150 = vcmp.eq.s32.totalorder %v149, %v48
    %v151 = vsel %vm150, 1, 0
    %v152 = vcvt.s32.f32 %v151
    %v153 = vadd.f32 %v146, %v152
    %154 = vset.pattern.permute.xlu0 15
    %155 = vperm.xlu0 %154, %v38
    %v156 = vpop.permute.xlu0 %155
    %vm157 = vcmp.eq.s32.totalorder %v156, %v48
    %v158 = vsel %vm157, 1, 0
    %v159 = vcvt.s32.f32 %v158
    %v160 = vadd.f32 %v153, %v159
    // Predicated region
    $region22: #{tpu_custom_call.1} parent=1 // pred_check
      %p161 = pneg %p39
    $region23: #{tpu_custom_call.1} parent=1 // pred_check_branch
      %163 = sbr.rel (%p161) target = $region25
    $region24: #{tpu_custom_call.1} parent=1 // pred_region
      %v164 = vsub.f32 16.0, %v160
      %vm165 = vcmask 7168
      %166 = vst.msk [vmem:[#allocation3] sm:$0xff] %vm165, %v164
    $region25: #{tpu_custom_call.1} parent=1 // pred_fallthru
      _
    %v167 = vld [vmem:[#allocation2] sm:$0xff]
    %v168 = vld [vmem:[#allocation7] sm:$0xff]
    %v169 = vld [vmem:[#allocation7 + $0x8] sm:$0xff]
    %v170 = vld [vmem:[#allocation7 + $0x10] sm:$0xff]
    %v171 = vld [vmem:[#allocation7 + $0x18] sm:$0xff]
    %v172 = vld [vmem:[#allocation7 + $0x20] sm:$0xff]
    %v173 = vld [vmem:[#allocation7 + $0x28] sm:$0xff]
    %v174 = vld [vmem:[#allocation7 + $0x30] sm:$0xff]
    %v175 = vld [vmem:[#allocation7 + $0x38] sm:$0xff]
    %v176 = vld [vmem:[#allocation7 + $0x40] sm:$0xff]
    %v177 = vld [vmem:[#allocation7 + $0x48] sm:$0xff]
    %v178 = vld [vmem:[#allocation7 + $0x50] sm:$0xff]
    %v179 = vld [vmem:[#allocation7 + $0x58] sm:$0xff]
    %v180 = vld [vmem:[#allocation7 + $0x60] sm:$0xff]
    %v181 = vld [vmem:[#allocation7 + $0x68] sm:$0xff]
    %v182 = vld [vmem:[#allocation7 + $0x70] sm:$0xff]
    %v183 = vld [vmem:[#allocation7 + $0x78] sm:$0xff]
    %184 = vmatprep.subr.mxu0 0.0
    %185 = vmatpush1.msra.mxu0 %v168
    %186 = vmatprep.subr.mxu0 0.0
    %187 = vmatpush1.msra.mxu0 %v169
    %188 = vmatprep.subr.mxu0 0.0
    %189 = vmatpush1.msra.mxu0 %v170
    %190 = vmatprep.subr.mxu0 0.0
    %191 = vmatpush1.msra.mxu0 %v171
    %192 = vmatprep.subr.mxu0 0.0
    %193 = vmatpush1.msra.mxu0 %v172
    %194 = vmatprep.subr.mxu0 0.0
    %195 = vmatpush1.msra.mxu0 %v173
    %196 = vmatprep.subr.mxu0 0.0
    %197 = vmatpush1.msra.mxu0 %v174
    %198 = vmatprep.subr.mxu0 0.0
    %199 = vmatpush1.msra.mxu0 %v175
    %200 = vmatprep.subr.mxu0 0.0
    %201 = vmatpush1.msra.mxu0 %v176
    %202 = vmatprep.subr.mxu0 0.0
    %203 = vmatpush1.msra.mxu0 %v177
    %204 = vmatprep.subr.mxu0 0.0
    %205 = vmatpush1.msra.mxu0 %v178
    %206 = vmatprep.subr.mxu0 0.0
    %207 = vmatpush1.msra.mxu0 %v179
    %208 = vmatprep.subr.mxu0 0.0
    %209 = vmatpush1.msra.mxu0 %v180
    %210 = vmatprep.subr.mxu0 0.0
    %211 = vmatpush1.msra.mxu0 %v181
    %212 = vmatprep.subr.mxu0 0.0
    %213 = vmatpush1.msra.mxu0 %v182
    %214 = vmatprep.subr.mxu0 0.0
    %215 = vmatpush1.msra.mxu0 %v183
    %216 = vmatprep.subr.mxu0 0.0
    %217 = vmatpush1.msra.mxu0 0.0
    %218 = vmatprep.subr.mxu0 0.0
    %219 = vmatpush1.msra.mxu0 0.0
    %220 = vmatprep.subr.mxu0 0.0
    %221 = vmatpush1.msra.mxu0 0.0
    %222 = vmatprep.subr.mxu0 0.0
    %223 = vmatpush1.msra.mxu0 0.0
    %224 = vmatprep.subr.mxu0 0.0
    %225 = vmatpush1.msra.mxu0 0.0
    %226 = vmatprep.subr.mxu0 0.0
    %227 = vmatpush1.msra.mxu0 0.0
    %228 = vmatprep.subr.mxu0 0.0
    %229 = vmatpush1.msra.mxu0 0.0
    %230 = vmatprep.subr.mxu0 0.0
    %231 = vmatpush1.msra.mxu0 0.0
    %232 = vmatprep.subr.mxu0 0.0
    %233 = vmatpush1.msra.mxu0 0.0
    %234 = vmatprep.subr.mxu0 0.0
    %235 = vmatpush1.msra.mxu0 0.0
    %236 = vmatprep.subr.mxu0 0.0
    %237 = vmatpush1.msra.mxu0 0.0
    %238 = vmatprep.subr.mxu0 0.0
    %239 = vmatpush1.msra.mxu0 0.0
    %240 = vmatprep.subr.mxu0 0.0
    %241 = vmatpush1.msra.mxu0 0.0
    %242 = vmatprep.subr.mxu0 0.0
    %243 = vmatpush1.msra.mxu0 0.0
    %244 = vmatprep.subr.mxu0 0.0
    %245 = vmatpush1.msra.mxu0 0.0
    %246 = vmatprep.subr.mxu0 0.0
    %247 = vmatpush1.msra.mxu0 0.0
    %248 = vmatprep.mubr.f32.mxu0 0.0
    %249 = vmatmul.mubr.f32.gmra.mrb[0].mxu0 %v160
    %v250 = vpop.f32.mrb[0].mxu0
    %v251 = vadd.f32 0.0, %v250
    %v252 = vpop.f32.mrb[0].mxu0
    %253 = vdwg.mxu0
    %v254 = vadd.f32 %v167, %v251
    %255 = vst [vmem:[#allocation2] sm:$0xff] %v254
    // Predicated region
    $region26: #{tpu_custom_call.1} parent=1 // pred_check
      %p256 = pneg %p39
    $region27: #{tpu_custom_call.1} parent=1 // pred_check_branch
      %258 = sbr.rel (%p256) target = $region29
    $region28: #{tpu_custom_call.1} parent=1 // pred_region
      %v259 = vld [vmem:[#allocation3] sm:$0xff]
      %v260 = vrcp.pop %v259
      %v261 = vld [vmem:[#allocation2] sm:$0xff]
      %263 = vset.pattern.permute.xlu0 0
      %264 = vperm.xlu0 %263, %v260
      %v265 = vpop.permute.xlu0 %264
      %v267 = vmul.f32 %v261, %v265
      %268 = vst [vmem:[#allocation9] sm:$0xff] %v267
    $region29: #{tpu_custom_call.1} parent=1 // pred_fallthru
      _
    // Predicated region
    $region30: #{tpu_custom_call.1} parent=1 // pred_check
      _
    $region31: #{tpu_custom_call.1} parent=1 // pred_check_branch
      %270 = sbr.rel (0) target = $region33
    $region32: #{tpu_custom_call.1} parent=1 // pred_region
      %s272 = ssub.s32 128, 128
      %273 = vsyncadd [#allocation6], %s272
      %s275 = sshll.u32 [#allocation9], 4
      %s276 = int_to_ptr.vmem [resolvable:$true] %s275
      %278 = dma.vmem_to_hbm [thread:$0]  %s276, 128, %s2, [#allocation6]
    $region33: #{tpu_custom_call.1} parent=1 // pred_fallthru
      _
    // Predicated region
    $region34: #{tpu_custom_call.1} parent=1 // pred_check
      _
    $region35: #{tpu_custom_call.1} parent=1 // pred_check_branch
      %280 = sbr.rel (0) target = $region37
    $region36: #{tpu_custom_call.1} parent=1 // pred_region
      %281 = dma.done [#allocation6], 128
    $region37: #{tpu_custom_call.1} parent=1 // pred_fallthru
      _
    %282 = vsyncpa [#allocation5], 1
    %283 = vsyncpa [#allocation8], 1
    %284 = vsyncpa [#allocation6], 1

</llo_original>
